<compile_context>
chip_gen: v7x
topology: tpu7x:2x2x1
jax: 0.10.0
libtpu: 0.0.40
codegen_flags: <defaults>
</compile_context>

<pallas_src>
import functools

import jax
import jax.numpy as jnp
from jax import lax
from jax.experimental import pallas as pl
from jax.experimental.pallas import tpu as pltpu


def _round_up(x, m):
    return ((x + m - 1) // m) * m


def _topk_sae_kernel(x_ref, w_enc_ref, b_enc_ref, b_dec_ref, w_dec_ref,
                     recon_ref, feat_ref, idx_ref, *, k: int):
    # ---- encoder: latent = relu(x @ W_enc + b_enc') ----
    # b_enc' = b_enc - b_dec @ W_enc was folded in the wrapper, so x feeds the
    # MXU in its native dtype (no per-tile (tm, E) subtract / upcast).
    x = x_ref[...]                                            # (tm, E)
    latent = jnp.dot(x, w_enc_ref[...],
                     preferred_element_type=jnp.float32)      # (tm, F) f32 acc
    latent = jnp.maximum(latent + b_enc_ref[...], 0.0)

    tm, n_feat = latent.shape
    col_ids = lax.broadcasted_iota(jnp.int32, latent.shape, 1)   # (tm, F)

    # ---- top-k along the feature axis (small k, unrolled iterative argmax) ----
    idx_pad = idx_ref.shape[-1]                                  # lane-dense (>=128)
    lane = lax.broadcasted_iota(jnp.int32, (tm, idx_pad), 1)
    idx_out = jnp.zeros((tm, idx_pad), jnp.int32)

    work = latent
    kth_val = None
    for j in range(k):
        m = jnp.max(work, axis=-1, keepdims=True)                # (tm, 1)
        is_max = work == m
        idx = jnp.min(jnp.where(is_max, col_ids, n_feat),
                      axis=-1, keepdims=True)                    # first argmax
        idx_out = jnp.where(lane == j, idx, idx_out)             # place in lane j
        kth_val = m
        if j + 1 < k:                                            # skip dead removal
            work = jnp.where(col_ids == idx, -jnp.inf, work)

    # ---- threshold mask (same semantics as latent >= topk_vals[..., -1:]) ----
    mask = (latent >= kth_val).astype(jnp.float32)
    feat = latent * mask                                         # (tm, F) f32

    # ---- decoder: recon = feat @ W_dec + b_dec ----
    recon = jnp.dot(feat.astype(w_dec_ref.dtype), w_dec_ref[...],
                    preferred_element_type=jnp.float32) + b_dec_ref[...]

    feat_ref[...] = feat.astype(feat_ref.dtype)
    recon_ref[...] = recon.astype(recon_ref.dtype)
    idx_ref[...] = idx_out


def topk_sae_forward(x, w_enc, b_enc, w_dec, b_dec, k, *, tm=128):
    """x: (B, T, E). Returns (x_reconstructed, feature_magnitudes, top_k_indices)."""
    B, T, E = x.shape
    assert w_enc.shape[0] == E
    F = w_enc.shape[1]
    M = B * T

    # Row tile: default 128 (fills the MXU); clamp + pad for tiny inputs.
    tm = min(tm, _round_up(M, 8))
    M_pad = _round_up(M, tm)
    idx_pad = max(128, _round_up(k, 128))          # lane-dense index output

    x2d = x.reshape(M, E)
    if M_pad != M:
        x2d = jnp.pad(x2d, ((0, M_pad - M), (0, 0)))

    # Fold the pre-encoder bias: (x - b_dec) @ W_enc + b_enc == x @ W_enc + b_enc'.
    b_enc_folded = (b_enc.astype(jnp.float32)
                    - b_dec.astype(jnp.float32) @ w_enc.astype(jnp.float32)
                    ).reshape(1, F)
    b_dec2 = b_dec.astype(jnp.float32).reshape(1, E)

    kernel = functools.partial(_topk_sae_kernel, k=k)

    # VMEM budget: double-buffered resident weights + pipelined activation tiles
    # + f32 intermediates; clamped below physical VMEM.
    weight_bytes = 2 * (E * F * w_enc.dtype.itemsize
                        + F * E * w_dec.dtype.itemsize + 4 * F + 4 * E)
    tile_bytes = 2 * tm * (2 * E * x.dtype.itemsize
                           + F * x.dtype.itemsize + 4 * idx_pad)
    scratch_bytes = 6 * tm * F * 4
    vmem_limit = int(min(112 << 20,
                         max(32 << 20,
                             weight_bytes + tile_bytes + scratch_bytes + (4 << 20))))

    recon, feat, idx = pl.pallas_call(
        kernel,
        out_shape=(
            jax.ShapeDtypeStruct((M_pad, E), x.dtype),       # x_reconstructed
            jax.ShapeDtypeStruct((M_pad, F), x.dtype),       # feature_magnitudes
            jax.ShapeDtypeStruct((M_pad, idx_pad), jnp.int32),  # top_k_indices (padded)
        ),
        grid_spec=pltpu.PrefetchScalarGridSpec(
            num_scalar_prefetch=0,
            grid=(M_pad // tm,),
            in_specs=[
                pl.BlockSpec((tm, E), lambda i: (i, 0)),   # x rows
                pl.BlockSpec((E, F), lambda i: (0, 0)),    # W_enc (resident)
                pl.BlockSpec((1, F), lambda i: (0, 0)),    # b_enc' (folded)
                pl.BlockSpec((1, E), lambda i: (0, 0)),    # b_dec
                pl.BlockSpec((F, E), lambda i: (0, 0)),    # W_dec (resident)
            ],
            out_specs=[
                pl.BlockSpec((tm, E), lambda i: (i, 0)),
                pl.BlockSpec((tm, F), lambda i: (i, 0)),
                pl.BlockSpec((tm, idx_pad), lambda i: (i, 0)),
            ],
        ),
        compiler_params=pltpu.CompilerParams(
            dimension_semantics=("parallel",),
            vmem_limit_bytes=vmem_limit),
    )(x2d, w_enc, b_enc_folded, b_dec2, w_dec)

    recon = recon[:M].reshape(B, T, E)
    feat = feat[:M].reshape(B, T, F)
    idx = idx[:M, :k].reshape(B, T, k)
    return recon, feat, idx


def _reference_forward(x, w_enc, b_enc, w_dec, b_dec, k):
    """Pure-JAX reference (mirrors the PyTorch module)."""
    latent = jax.nn.relu((x - b_dec) @ w_enc + b_enc)
    top_vals, _ = lax.top_k(latent, k)
    thresh = top_vals[..., -1:]
    feat = latent * (latent >= thresh).astype(latent.dtype)
    recon = feat @ w_dec + b_dec
    return recon, feat


if __name__ == "__main__":
    # Small shapes consistent with the module: (B, T, E) activations.
    B, T, E, Ffeat, K = 2, 8, 32, 64, 4

    key = jax.random.PRNGKey(0)
    kx, kwe, kbe, kbd = jax.random.split(key, 4)

    x = jax.random.normal(kx, (B, T, E), dtype=jnp.float32)

    # Deterministic parameter init (synthetic; standard tied-ish SAE init).
    w_enc = jax.random.normal(kwe, (E, Ffeat), dtype=jnp.float32) * (1.0 / jnp.sqrt(E))
    b_enc = jax.random.normal(kbe, (Ffeat,), dtype=jnp.float32) * 0.01
    b_dec = jax.random.normal(kbd, (E,), dtype=jnp.float32) * 0.01
    w_dec = w_enc.T / (jnp.linalg.norm(w_enc.T, axis=-1, keepdims=True) + 1e-6)

    recon, feat, idx = topk_sae_forward(x, w_enc, b_enc, w_dec, b_dec, K)
    jax.block_until_ready((recon, feat, idx))

    # Correctness check against pure-JAX reference.
    recon_ref, feat_ref = _reference_forward(x, w_enc, b_enc, w_dec, b_dec, K)
    assert jnp.allclose(feat, feat_ref, rtol=1e-3, atol=1e-3)
    assert jnp.allclose(recon, recon_ref, rtol=1e-3, atol=1e-3)
    assert idx.shape == (B, T, K)
    # Every returned index must point at a feature that survived the mask.
    picked = jnp.take_along_axis(feat, idx, axis=-1)
    thresh = jnp.sort(feat_ref, axis=-1)[..., -K:][..., :1]
    assert bool(jnp.all(picked >= jnp.minimum(thresh, 0.0)))

    # TODO(synk): EncoderOutput / SAELossComponents dataclasses (loss bookkeeping,
    # MSE etc.) are host-side plain-JAX and intentionally not part of the kernel.
    print("KERNEL_OK")
</pallas_src>

<mosaic_0001>
module attributes {stable_mosaic.version = 11 : i64} {
  func.func @_topk_sae_kernel(%arg0: i32, %arg1: memref<16x32xf32, #tpu.memory_space<vmem>>, %arg2: memref<32x64xf32, #tpu.memory_space<vmem>>, %arg3: memref<1x64xf32, #tpu.memory_space<vmem>>, %arg4: memref<1x32xf32, #tpu.memory_space<vmem>>, %arg5: memref<64x32xf32, #tpu.memory_space<vmem>>, %arg6: memref<16x32xf32, #tpu.memory_space<vmem>>, %arg7: memref<16x64xf32, #tpu.memory_space<vmem>>, %arg8: memref<16x128xi32, #tpu.memory_space<vmem>>) attributes {dimension_semantics = [#tpu.dimension_semantics<parallel>], iteration_bounds = array<i64: 1>, scalar_prefetch = 0 : i64, scratch_operands = 0 : i64, tpu.core_type = #tpu.core_type<tc>, window_params = [{transform_indices = @transform_0, window_bounds = array<i64: 16, 32>}, {pipeline_mode = #tpu.pipeline_mode<synchronous>, transform_indices = @transform_1, window_bounds = array<i64: 32, 64>}, {pipeline_mode = #tpu.pipeline_mode<synchronous>, transform_indices = @transform_2, window_bounds = array<i64: 1, 64>}, {pipeline_mode = #tpu.pipeline_mode<synchronous>, transform_indices = @transform_3, window_bounds = array<i64: 1, 32>}, {pipeline_mode = #tpu.pipeline_mode<synchronous>, transform_indices = @transform_4, window_bounds = array<i64: 64, 32>}, {transform_indices = @transform_5, window_bounds = array<i64: 16, 32>}, {transform_indices = @transform_6, window_bounds = array<i64: 16, 64>}, {transform_indices = @transform_7, window_bounds = array<i64: 16, 128>}]} {
    %c0 = arith.constant 0 : index
    %c0_0 = arith.constant 0 : index
    %0 = vector.load %arg1[%c0, %c0_0] : memref<16x32xf32, #tpu.memory_space<vmem>>, vector<16x32xf32>
    %c0_1 = arith.constant 0 : index
    %c0_2 = arith.constant 0 : index
    %1 = vector.load %arg2[%c0_1, %c0_2] : memref<32x64xf32, #tpu.memory_space<vmem>>, vector<32x64xf32>
    %cst = arith.constant dense<0.000000e+00> : vector<16x64xf32>
    %2 = tpu.matmul %0, %1, %cst {dimension_numbers = #tpu.dot_dimension_numbers<[1], [0], [0], [1], [0, 0, 1, 1], [], []>} : vector<16x32xf32>, vector<32x64xf32>, vector<16x64xf32> -> vector<16x64xf32>
    %c0_3 = arith.constant 0 : index
    %c0_4 = arith.constant 0 : index
    %3 = vector.load %arg3[%c0_3, %c0_4] : memref<1x64xf32, #tpu.memory_space<vmem>>, vector<1x64xf32>
    %4 = vector.broadcast %3 : vector<1x64xf32> to vector<16x64xf32>
    %5 = arith.addf %2, %4 : vector<16x64xf32>
    %cst_5 = arith.constant 0.000000e+00 : f32
    %6 = vector.broadcast %cst_5 : f32 to vector<16x64xf32>
    %7 = arith.maximumf %5, %6 : vector<16x64xf32>
    %8 = tpu.iota {dimensions = array<i32: 1>} : vector<16x64xi32>
    %9 = tpu.iota {dimensions = array<i32: 1>} : vector<16x128xi32>
    %c0_i32 = arith.constant 0 : i32
    %10 = vector.broadcast %c0_i32 : i32 to vector<16x128xi32>
    %cst_6 = arith.constant dense<0xFF800000> : vector<16xf32>
    %11 = vector.multi_reduction <maximumf>, %7, %cst_6 [1] : vector<16x64xf32> to vector<16xf32>
    %12 = vector.shape_cast %11 : vector<16xf32> to vector<16x1xf32>
    %13 = vector.broadcast %12 : vector<16x1xf32> to vector<16x64xf32>
    %14 = arith.cmpf oeq, %7, %13 : vector<16x64xf32>
    %c64_i32 = arith.constant 64 : i32
    %15 = vector.broadcast %c64_i32 : i32 to vector<16x64xi32>
    %16 = arith.select %14, %8, %15 : vector<16x64xi1>, vector<16x64xi32>
    %cst_7 = arith.constant dense<2147483647> : vector<16xi32>
    %17 = vector.multi_reduction <minsi>, %16, %cst_7 [1] : vector<16x64xi32> to vector<16xi32>
    %18 = vector.shape_cast %17 : vector<16xi32> to vector<16x1xi32>
    %c0_i32_8 = arith.constant 0 : i32
    %19 = vector.broadcast %c0_i32_8 : i32 to vector<16x128xi32>
    %20 = arith.cmpi eq, %9, %19 : vector<16x128xi32>
    %21 = vector.shape_cast %18 : vector<16x1xi32> to vector<16x1xi32>
    %22 = vector.broadcast %21 : vector<16x1xi32> to vector<16x128xi32>
    %23 = arith.select %20, %22, %10 : vector<16x128xi1>, vector<16x128xi32>
    %24 = vector.broadcast %18 : vector<16x1xi32> to vector<16x64xi32>
    %25 = arith.cmpi eq, %8, %24 : vector<16x64xi32>
    %cst_9 = arith.constant 0xFF800000 : f32
    %26 = vector.broadcast %cst_9 : f32 to vector<16x64xf32>
    %27 = arith.select %25, %26, %7 : vector<16x64xi1>, vector<16x64xf32>
    %cst_10 = arith.constant dense<0xFF800000> : vector<16xf32>
    %28 = vector.multi_reduction <maximumf>, %27, %cst_10 [1] : vector<16x64xf32> to vector<16xf32>
    %29 = vector.shape_cast %28 : vector<16xf32> to vector<16x1xf32>
    %30 = vector.broadcast %29 : vector<16x1xf32> to vector<16x64xf32>
    %31 = arith.cmpf oeq, %27, %30 : vector<16x64xf32>
    %c64_i32_11 = arith.constant 64 : i32
    %32 = vector.broadcast %c64_i32_11 : i32 to vector<16x64xi32>
    %33 = arith.select %31, %8, %32 : vector<16x64xi1>, vector<16x64xi32>
    %cst_12 = arith.constant dense<2147483647> : vector<16xi32>
    %34 = vector.multi_reduction <minsi>, %33, %cst_12 [1] : vector<16x64xi32> to vector<16xi32>
    %35 = vector.shape_cast %34 : vector<16xi32> to vector<16x1xi32>
    %c1_i32 = arith.constant 1 : i32
    %36 = vector.broadcast %c1_i32 : i32 to vector<16x128xi32>
    %37 = arith.cmpi eq, %9, %36 : vector<16x128xi32>
    %38 = vector.shape_cast %35 : vector<16x1xi32> to vector<16x1xi32>
    %39 = vector.broadcast %38 : vector<16x1xi32> to vector<16x128xi32>
    %40 = arith.select %37, %39, %23 : vector<16x128xi1>, vector<16x128xi32>
    %41 = vector.broadcast %35 : vector<16x1xi32> to vector<16x64xi32>
    %42 = arith.cmpi eq, %8, %41 : vector<16x64xi32>
    %cst_13 = arith.constant 0xFF800000 : f32
    %43 = vector.broadcast %cst_13 : f32 to vector<16x64xf32>
    %44 = arith.select %42, %43, %27 : vector<16x64xi1>, vector<16x64xf32>
    %cst_14 = arith.constant dense<0xFF800000> : vector<16xf32>
    %45 = vector.multi_reduction <maximumf>, %44, %cst_14 [1] : vector<16x64xf32> to vector<16xf32>
    %46 = vector.shape_cast %45 : vector<16xf32> to vector<16x1xf32>
    %47 = vector.broadcast %46 : vector<16x1xf32> to vector<16x64xf32>
    %48 = arith.cmpf oeq, %44, %47 : vector<16x64xf32>
    %c64_i32_15 = arith.constant 64 : i32
    %49 = vector.broadcast %c64_i32_15 : i32 to vector<16x64xi32>
    %50 = arith.select %48, %8, %49 : vector<16x64xi1>, vector<16x64xi32>
    %cst_16 = arith.constant dense<2147483647> : vector<16xi32>
    %51 = vector.multi_reduction <minsi>, %50, %cst_16 [1] : vector<16x64xi32> to vector<16xi32>
    %52 = vector.shape_cast %51 : vector<16xi32> to vector<16x1xi32>
    %c2_i32 = arith.constant 2 : i32
    %53 = vector.broadcast %c2_i32 : i32 to vector<16x128xi32>
    %54 = arith.cmpi eq, %9, %53 : vector<16x128xi32>
    %55 = vector.shape_cast %52 : vector<16x1xi32> to vector<16x1xi32>
    %56 = vector.broadcast %55 : vector<16x1xi32> to vector<16x128xi32>
    %57 = arith.select %54, %56, %40 : vector<16x128xi1>, vector<16x128xi32>
    %58 = vector.broadcast %52 : vector<16x1xi32> to vector<16x64xi32>
    %59 = arith.cmpi eq, %8, %58 : vector<16x64xi32>
    %cst_17 = arith.constant 0xFF800000 : f32
    %60 = vector.broadcast %cst_17 : f32 to vector<16x64xf32>
    %61 = arith.select %59, %60, %44 : vector<16x64xi1>, vector<16x64xf32>
    %cst_18 = arith.constant dense<0xFF800000> : vector<16xf32>
    %62 = vector.multi_reduction <maximumf>, %61, %cst_18 [1] : vector<16x64xf32> to vector<16xf32>
    %63 = vector.shape_cast %62 : vector<16xf32> to vector<16x1xf32>
    %64 = vector.broadcast %63 : vector<16x1xf32> to vector<16x64xf32>
    %65 = arith.cmpf oeq, %61, %64 : vector<16x64xf32>
    %c64_i32_19 = arith.constant 64 : i32
    %66 = vector.broadcast %c64_i32_19 : i32 to vector<16x64xi32>
    %67 = arith.select %65, %8, %66 : vector<16x64xi1>, vector<16x64xi32>
    %cst_20 = arith.constant dense<2147483647> : vector<16xi32>
    %68 = vector.multi_reduction <minsi>, %67, %cst_20 [1] : vector<16x64xi32> to vector<16xi32>
    %69 = vector.shape_cast %68 : vector<16xi32> to vector<16x1xi32>
    %c3_i32 = arith.constant 3 : i32
    %70 = vector.broadcast %c3_i32 : i32 to vector<16x128xi32>
    %71 = arith.cmpi eq, %9, %70 : vector<16x128xi32>
    %72 = vector.shape_cast %69 : vector<16x1xi32> to vector<16x1xi32>
    %73 = vector.broadcast %72 : vector<16x1xi32> to vector<16x128xi32>
    %74 = arith.select %71, %73, %57 : vector<16x128xi1>, vector<16x128xi32>
    %75 = vector.broadcast %63 : vector<16x1xf32> to vector<16x64xf32>
    %76 = arith.cmpf oge, %7, %75 : vector<16x64xf32>
    %77 = arith.extui %76 : vector<16x64xi1> to vector<16x64xi32>
    %78 = arith.sitofp %77 : vector<16x64xi32> to vector<16x64xf32>
    %79 = arith.mulf %7, %78 : vector<16x64xf32>
    %c0_21 = arith.constant 0 : index
    %c0_22 = arith.constant 0 : index
    %80 = vector.load %arg5[%c0_21, %c0_22] : memref<64x32xf32, #tpu.memory_space<vmem>>, vector<64x32xf32>
    %cst_23 = arith.constant dense<0.000000e+00> : vector<16x32xf32>
    %81 = tpu.matmul %79, %80, %cst_23 {dimension_numbers = #tpu.dot_dimension_numbers<[1], [0], [0], [1], [0, 0, 1, 1], [], []>} : vector<16x64xf32>, vector<64x32xf32>, vector<16x32xf32> -> vector<16x32xf32>
    %c0_24 = arith.constant 0 : index
    %c0_25 = arith.constant 0 : index
    %82 = vector.load %arg4[%c0_24, %c0_25] : memref<1x32xf32, #tpu.memory_space<vmem>>, vector<1x32xf32>
    %83 = vector.broadcast %82 : vector<1x32xf32> to vector<16x32xf32>
    %84 = arith.addf %81, %83 : vector<16x32xf32>
    %c0_26 = arith.constant 0 : index
    %c0_27 = arith.constant 0 : index
    %85 = vector.load %arg7[%c0_26, %c0_27] : memref<16x64xf32, #tpu.memory_space<vmem>>, vector<16x64xf32>
    tpu.vector_store %arg7[%c0_26, %c0_27], %79 {strides = array<i32>} : memref<16x64xf32, #tpu.memory_space<vmem>>, vector<16x64xf32>,
    %c0_28 = arith.constant 0 : index
    %c0_29 = arith.constant 0 : index
    %86 = vector.load %arg6[%c0_28, %c0_29] : memref<16x32xf32, #tpu.memory_space<vmem>>, vector<16x32xf32>
    tpu.vector_store %arg6[%c0_28, %c0_29], %84 {strides = array<i32>} : memref<16x32xf32, #tpu.memory_space<vmem>>, vector<16x32xf32>,
    %c0_30 = arith.constant 0 : index
    %c0_31 = arith.constant 0 : index
    %87 = vector.load %arg8[%c0_30, %c0_31] : memref<16x128xi32, #tpu.memory_space<vmem>>, vector<16x128xi32>
    tpu.vector_store %arg8[%c0_30, %c0_31], %74 {strides = array<i32>} : memref<16x128xi32, #tpu.memory_space<vmem>>, vector<16x128xi32>,
    return
  }
  func.func @transform_0(%arg0: i32) -> (i32, i32) {
    %c0_i32 = arith.constant 0 : i32
    %c0_i32_0 = arith.constant 0 : i32
    return %arg0, %c0_i32 : i32, i32
  }
  func.func @transform_1(%arg0: i32) -> (i32, i32) {
    %c0_i32 = arith.constant 0 : i32
    %c0_i32_0 = arith.constant 0 : i32
    %c0_i32_1 = arith.constant 0 : i32
    return %c0_i32, %c0_i32_0 : i32, i32
  }
  func.func @transform_2(%arg0: i32) -> (i32, i32) {
    %c0_i32 = arith.constant 0 : i32
    %c0_i32_0 = arith.constant 0 : i32
    %c0_i32_1 = arith.constant 0 : i32
    return %c0_i32, %c0_i32_0 : i32, i32
  }
  func.func @transform_3(%arg0: i32) -> (i32, i32) {
    %c0_i32 = arith.constant 0 : i32
    %c0_i32_0 = arith.constant 0 : i32
    %c0_i32_1 = arith.constant 0 : i32
    return %c0_i32, %c0_i32_0 : i32, i32
  }
  func.func @transform_4(%arg0: i32) -> (i32, i32) {
    %c0_i32 = arith.constant 0 : i32
    %c0_i32_0 = arith.constant 0 : i32
    %c0_i32_1 = arith.constant 0 : i32
    return %c0_i32, %c0_i32_0 : i32, i32
  }
  func.func @transform_5(%arg0: i32) -> (i32, i32) {
    %c0_i32 = arith.constant 0 : i32
    %c0_i32_0 = arith.constant 0 : i32
    return %arg0, %c0_i32 : i32, i32
  }
  func.func @transform_6(%arg0: i32) -> (i32, i32) {
    %c0_i32 = arith.constant 0 : i32
    %c0_i32_0 = arith.constant 0 : i32
    return %arg0, %c0_i32 : i32, i32
  }
  func.func @transform_7(%arg0: i32) -> (i32, i32) {
    %c0_i32 = arith.constant 0 : i32
    %c0_i32_0 = arith.constant 0 : i32
    return %arg0, %c0_i32 : i32, i32
  }
}

</mosaic_0001>

<llo_original>
// kernel: tpu_custom_call.1
$region0: #{tpu_custom_call.1}
  #allocation0 [shape = 'u32[]', space=smem, size = 0x4, offset = 0x4, fixed_abs, tag = 'smem constant byte address 0x4 - core index']
  #allocation1 [shape = 'u32[144,128]{1,0:T(1,128)}', space=vmem, size = 0x12000, scoped, tag = 'internal scratch']
  %s0 = inlined_call_operand.vmem [shape: f32[16,32], index: 0, kind: input, shape index: {}]
  %s1 = inlined_call_operand.vmem [shape: f32[32,64], index: 1, kind: input, shape index: {}]
  %s2 = inlined_call_operand.vmem [shape: f32[1,64], index: 2, kind: input, shape index: {}]
  %s3 = inlined_call_operand.vmem [shape: f32[1,32], index: 3, kind: input, shape index: {}]
  %s4 = inlined_call_operand.vmem [shape: f32[64,32], index: 4, kind: input, shape index: {}]
  %s5 = inlined_call_operand.hbm [shape: f32[16,32], index: 5, kind: output, shape index: {0}]
  %s6 = inlined_call_operand.hbm [shape: f32[16,64], index: 6, kind: output, shape index: {1}]
  %s7 = inlined_call_operand.hbm [shape: s32[16,128], index: 7, kind: output, shape index: {2}]
  %8 = xla_tuple %s5, %s6, %s7
  %s9 = sld [smem:[#allocation0]]
  $region46: #{tpu_custom_call.1} parent=0
    _
  %s11 = ssub.s32 1, %s9
  %s12 = scalar_select 0, %s11, %s9
  $region1: #{tpu_custom_call.1} parent=0
    #allocation2 [shape = 'u8[8192]{0}', space=vmem, size = 0x2000, scoped, tag = 'output window, operand 0, single buffered']
    #allocation3 [shape = 's32[1]{0}', space=sflag, size = 0x4, scoped, tag = 'scoped memory for tpu_custom_call.1']
    #allocation4 [shape = 'u8[8192]{0}', space=vmem, size = 0x2000, scoped, tag = 'output window, operand 1, single buffered']
    #allocation5 [shape = 's32[1]{0}', space=sflag, size = 0x4, scoped, tag = 'scoped memory for tpu_custom_call.1']
    #allocation6 [shape = 'u8[8192]{0}', space=vmem, size = 0x2000, scoped, tag = 'output window, operand 2, single buffered']
    %13 = vsyncpa [#allocation3], 0
    %14 = vsyncpa [#allocation5], 0
    // Predicated region
    $region2: #{tpu_custom_call.1} parent=1 // pred_check
      _
    $region3: #{tpu_custom_call.1} parent=1 // pred_check_branch
      %16 = sbr.rel (0) target = $region5
    $region4: #{tpu_custom_call.1} parent=1 // pred_region
      _
    $region5: #{tpu_custom_call.1} parent=1 // pred_fallthru
      _
    // Predicated region
    $region6: #{tpu_custom_call.1} parent=1 // pred_check
      _
    $region7: #{tpu_custom_call.1} parent=1 // pred_check_branch
      %18 = sbr.rel (0) target = $region9
    $region8: #{tpu_custom_call.1} parent=1 // pred_region
      _
    $region9: #{tpu_custom_call.1} parent=1 // pred_fallthru
      _
    // Predicated region
    $region10: #{tpu_custom_call.1} parent=1 // pred_check
      _
    $region11: #{tpu_custom_call.1} parent=1 // pred_check_branch
      %20 = sbr.rel (0) target = $region13
    $region12: #{tpu_custom_call.1} parent=1 // pred_region
      _
    $region13: #{tpu_custom_call.1} parent=1 // pred_fallthru
      _
    // Predicated region
    $region14: #{tpu_custom_call.1} parent=1 // pred_check
      _
    $region15: #{tpu_custom_call.1} parent=1 // pred_check_branch
      %22 = sbr.rel (0) target = $region17
    $region16: #{tpu_custom_call.1} parent=1 // pred_region
      _
    $region17: #{tpu_custom_call.1} parent=1 // pred_fallthru
      _
    // Predicated region
    $region18: #{tpu_custom_call.1} parent=1 // pred_check
      _
    $region19: #{tpu_custom_call.1} parent=1 // pred_check_branch
      %24 = sbr.rel (0) target = $region21
    $region20: #{tpu_custom_call.1} parent=1 // pred_region
      _
    $region21: #{tpu_custom_call.1} parent=1 // pred_fallthru
      _
    %v25 = vld [vmem:[%s0] sm:$0xff]
    %v26 = vld [vmem:[%s0 + $0x8] sm:$0xff]
    %v27 = vld [vmem:[%s1] sm:$0xff]
    %v28 = vld [vmem:[%s1 + $0x8] sm:$0xff]
    %v29 = vld [vmem:[%s1 + $0x10] sm:$0xff]
    %v30 = vld [vmem:[%s1 + $0x18] sm:$0xff]
    %v31 = vld [vmem:[%s2] sm:$0x1]
    %v33 = vlaneseq
    %v34 = vshrl.u32 %v33, 7
    %v35 = vsub.s32 0, %v34
    %v36 = vrot.slane %v31, %v35
    %vm38 = vcmask 261120
    %v40 = vsel %vm38, %v25, 0
    %v43 = vsel %vm38, %v26, 0
    %45 = vmatprep.subr.mxu0 0.0
    %46 = vmatpush1.msra.mxu0 %v27
    %47 = vmatprep.subr.mxu0 0.0
    %48 = vmatpush1.msra.mxu0 %v28
    %49 = vmatprep.subr.mxu0 0.0
    %50 = vmatpush1.msra.mxu0 %v29
    %51 = vmatprep.subr.mxu0 0.0
    %52 = vmatpush1.msra.mxu0 %v30
    %53 = vmatprep.subr.mxu0 0.0
    %54 = vmatpush1.msra.mxu0 0.0
    %55 = vmatprep.subr.mxu0 0.0
    %56 = vmatpush1.msra.mxu0 0.0
    %57 = vmatprep.subr.mxu0 0.0
    %58 = vmatpush1.msra.mxu0 0.0
    %59 = vmatprep.subr.mxu0 0.0
    %60 = vmatpush1.msra.mxu0 0.0
    %61 = vmatprep.subr.mxu0 0.0
    %62 = vmatpush1.msra.mxu0 0.0
    %63 = vmatprep.subr.mxu0 0.0
    %64 = vmatpush1.msra.mxu0 0.0
    %65 = vmatprep.subr.mxu0 0.0
    %66 = vmatpush1.msra.mxu0 0.0
    %67 = vmatprep.subr.mxu0 0.0
    %68 = vmatpush1.msra.mxu0 0.0
    %69 = vmatprep.subr.mxu0 0.0
    %70 = vmatpush1.msra.mxu0 0.0
    %71 = vmatprep.subr.mxu0 0.0
    %72 = vmatpush1.msra.mxu0 0.0
    %73 = vmatprep.subr.mxu0 0.0
    %74 = vmatpush1.msra.mxu0 0.0
    %75 = vmatprep.subr.mxu0 0.0
    %76 = vmatpush1.msra.mxu0 0.0
    %77 = vmatprep.subr.mxu0 0.0
    %78 = vmatpush1.msra.mxu0 0.0
    %79 = vmatprep.subr.mxu0 0.0
    %80 = vmatpush1.msra.mxu0 0.0
    %81 = vmatprep.subr.mxu0 0.0
    %82 = vmatpush1.msra.mxu0 0.0
    %83 = vmatprep.subr.mxu0 0.0
    %84 = vmatpush1.msra.mxu0 0.0
    %85 = vmatprep.subr.mxu0 0.0
    %86 = vmatpush1.msra.mxu0 0.0
    %87 = vmatprep.subr.mxu0 0.0
    %88 = vmatpush1.msra.mxu0 0.0
    %89 = vmatprep.subr.mxu0 0.0
    %90 = vmatpush1.msra.mxu0 0.0
    %91 = vmatprep.subr.mxu0 0.0
    %92 = vmatpush1.msra.mxu0 0.0
    %93 = vmatprep.subr.mxu0 0.0
    %94 = vmatpush1.msra.mxu0 0.0
    %95 = vmatprep.subr.mxu0 0.0
    %96 = vmatpush1.msra.mxu0 0.0
    %97 = vmatprep.subr.mxu0 0.0
    %98 = vmatpush1.msra.mxu0 0.0
    %99 = vmatprep.subr.mxu0 0.0
    %100 = vmatpush1.msra.mxu0 0.0
    %101 = vmatprep.subr.mxu0 0.0
    %102 = vmatpush1.msra.mxu0 0.0
    %103 = vmatprep.subr.mxu0 0.0
    %104 = vmatpush1.msra.mxu0 0.0
    %105 = vmatprep.subr.mxu0 0.0
    %106 = vmatpush1.msra.mxu0 0.0
    %107 = vmatprep.subr.mxu0 0.0
    %108 = vmatpush1.msra.mxu0 0.0
    %109 = vmatprep.mubr.f32.mxu0 0.0
    %110 = vmatmul.mubr.f32.gmra.mrb[0].mxu0 %v40
    %v111 = vpop.f32.mrb[0].mxu0
    %v112 = vadd.f32 %v36, %v111
    %v113 = vpop.f32.mrb[0].mxu0
    %114 = vmatprep.mubr.f32.mxu0 0.0
    %115 = vmatmul.mubr.f32.gmra.mrb[0].mxu0 %v43
    %v116 = vpop.f32.mrb[0].mxu0
    %v117 = vadd.f32 %v36, %v116
    %v118 = vpop.f32.mrb[0].mxu0
    %119 = vdwg.mxu0
    %v120 = vmax.f32 %v112, 0.0
    %v121 = vmax.f32 %v117, 0.0
    %v122 = vlaneseq
    %v123 = vand.u32 %v122, 127
    %vm124 = vcmask 523264
    %v125 = vsel %vm124, %v120, -inf
    %126 = vmax.xlane.f32.xlu0 %v125
    %v127 = vpop.xlane.xlu0 %126
    %v128 = vsel %vm124, %v121, -inf
    %129 = vmax.xlane.f32.xlu0 %v128
    %v130 = vpop.xlane.xlu0 %129
    %vm131 = vcmp.eq.f32.partialorder %v120, %v127
    %vm132 = vcmp.eq.f32.partialorder %v121, %v130
    %v133 = vsel %vm131, %v123, 64
    %v134 = vsel %vm132, %v123, 64
    %v135 = vsel %vm124, %v133, 2147483647
    %v136 = vand.u32 %v135, 65535
    %v137 = vshra.s32 %v135, 16
    %v138 = vcvt.s32.f32 %v136
    %v139 = vcvt.s32.f32 %v137
    %140 = vmin.xlane.f32.xlu0 %v139
    %v141 = vpop.xlane.xlu0 %140
    %vm142 = vcmp.eq.f32.partialorder %v139, %v141
    %v143 = vsel %vm142, %v138, inf
    %144 = vmin.xlane.f32.xlu0 %v143
    %v145 = vpop.xlane.xlu0 %144
    %v146 = vcvt.f32.s32 %v145
    %v147 = vcvt.f32.s32 %v141
    %v148 = vshll.u32 %v147, 16
    %v149 = vadd.s32 %v148, %v146
    %v150 = vsel %vm124, %v134, 2147483647
    %v151 = vand.u32 %v150, 65535
    %v152 = vshra.s32 %v150, 16
    %v153 = vcvt.s32.f32 %v151
    %v154 = vcvt.s32.f32 %v152
    %155 = vmin.xlane.f32.xlu0 %v154
    %v156 = vpop.xlane.xlu0 %155
    %vm157 = vcmp.eq.f32.partialorder %v154, %v156
    %v158 = vsel %vm157, %v153, inf
    %159 = vmin.xlane.f32.xlu0 %v158
    %v160 = vpop.xlane.xlu0 %159
    %v161 = vcvt.f32.s32 %v160
    %v162 = vcvt.f32.s32 %v156
    %v163 = vshll.u32 %v162, 16
    %v164 = vadd.s32 %v163, %v161
    %vm165 = vcmp.eq.s32.totalorder %v123, 0
    %v166 = vsel %vm165, %v149, 0
    %v167 = vsel %vm165, %v164, 0
    %vm168 = vcmp.eq.s32.totalorder %v123, %v149
    %vm169 = vcmp.eq.s32.totalorder %v123, %v164
    %v170 = vsel %vm168, -inf, %v120
    %v171 = vsel %vm169, -inf, %v121
    %v172 = vsel %vm124, %v170, -inf
    %173 = vmax.xlane.f32.xlu0 %v172
    %v174 = vpop.xlane.xlu0 %173
    %v175 = vsel %vm124, %v171, -inf
    %176 = vmax.xlane.f32.xlu0 %v175
    %v177 = vpop.xlane.xlu0 %176
    %vm178 = vcmp.eq.f32.partialorder %v170, %v174
    %vm179 = vcmp.eq.f32.partialorder %v171, %v177
    %v180 = vsel %vm178, %v123, 64
    %v181 = vsel %vm179, %v123, 64
    %v182 = vsel %vm124, %v180, 2147483647
    %v183 = vand.u32 %v182, 65535
    %v184 = vshra.s32 %v182, 16
    %v185 = vcvt.s32.f32 %v183
    %v186 = vcvt.s32.f32 %v184
    %187 = vmin.xlane.f32.xlu0 %v186
    %v188 = vpop.xlane.xlu0 %187
    %vm189 = vcmp.eq.f32.partialorder %v186, %v188
    %v190 = vsel %vm189, %v185, inf
    %191 = vmin.xlane.f32.xlu0 %v190
    %v192 = vpop.xlane.xlu0 %191
    %v193 = vcvt.f32.s32 %v192
    %v194 = vcvt.f32.s32 %v188
    %v195 = vshll.u32 %v194, 16
    %v196 = vadd.s32 %v195, %v193
    %v197 = vsel %vm124, %v181, 2147483647
    %v198 = vand.u32 %v197, 65535
    %v199 = vshra.s32 %v197, 16
    %v200 = vcvt.s32.f32 %v198
    %v201 = vcvt.s32.f32 %v199
    %202 = vmin.xlane.f32.xlu0 %v201
    %v203 = vpop.xlane.xlu0 %202
    %vm204 = vcmp.eq.f32.partialorder %v201, %v203
    %v205 = vsel %vm204, %v200, inf
    %206 = vmin.xlane.f32.xlu0 %v205
    %v207 = vpop.xlane.xlu0 %206
    %v208 = vcvt.f32.s32 %v207
    %v209 = vcvt.f32.s32 %v203
    %v210 = vshll.u32 %v209, 16
    %v211 = vadd.s32 %v210, %v208
    %vm212 = vcmp.eq.s32.totalorder %v123, 1
    %v213 = vsel %vm212, %v196, %v166
    %v214 = vsel %vm212, %v211, %v167
    %vm215 = vcmp.eq.s32.totalorder %v123, %v196
    %vm216 = vcmp.eq.s32.totalorder %v123, %v211
    %v217 = vsel %vm215, -inf, %v170
    %v218 = vsel %vm216, -inf, %v171
    %v219 = vsel %vm124, %v217, -inf
    %220 = vmax.xlane.f32.xlu0 %v219
    %v221 = vpop.xlane.xlu0 %220
    %v222 = vsel %vm124, %v218, -inf
    %223 = vmax.xlane.f32.xlu0 %v222
    %v224 = vpop.xlane.xlu0 %223
    %vm225 = vcmp.eq.f32.partialorder %v217, %v221
    %vm226 = vcmp.eq.f32.partialorder %v218, %v224
    %v227 = vsel %vm225, %v123, 64
    %v228 = vsel %vm226, %v123, 64
    %v229 = vsel %vm124, %v227, 2147483647
    %v230 = vand.u32 %v229, 65535
    %v231 = vshra.s32 %v229, 16
    %v232 = vcvt.s32.f32 %v230
    %v233 = vcvt.s32.f32 %v231
    %234 = vmin.xlane.f32.xlu0 %v233
    %v235 = vpop.xlane.xlu0 %234
    %vm236 = vcmp.eq.f32.partialorder %v233, %v235
    %v237 = vsel %vm236, %v232, inf
    %238 = vmin.xlane.f32.xlu0 %v237
    %v239 = vpop.xlane.xlu0 %238
    %v240 = vcvt.f32.s32 %v239
    %v241 = vcvt.f32.s32 %v235
    %v242 = vshll.u32 %v241, 16
    %v243 = vadd.s32 %v242, %v240
    %v244 = vsel %vm124, %v228, 2147483647
    %v245 = vand.u32 %v244, 65535
    %v246 = vshra.s32 %v244, 16
    %v247 = vcvt.s32.f32 %v245
    %v248 = vcvt.s32.f32 %v246
    %249 = vmin.xlane.f32.xlu0 %v248
    %v250 = vpop.xlane.xlu0 %249
    %vm251 = vcmp.eq.f32.partialorder %v248, %v250
    %v252 = vsel %vm251, %v247, inf
    %253 = vmin.xlane.f32.xlu0 %v252
    %v254 = vpop.xlane.xlu0 %253
    %v255 = vcvt.f32.s32 %v254
    %v256 = vcvt.f32.s32 %v250
    %v257 = vshll.u32 %v256, 16
    %v258 = vadd.s32 %v257, %v255
    %vm259 = vcmp.eq.s32.totalorder %v123, 2
    %v260 = vsel %vm259, %v243, %v213
    %v261 = vsel %vm259, %v258, %v214
    %vm262 = vcmp.eq.s32.totalorder %v123, %v243
    %vm263 = vcmp.eq.s32.totalorder %v123, %v258
    %v264 = vsel %vm262, -inf, %v217
    %v265 = vsel %vm263, -inf, %v218
    %v266 = vsel %vm124, %v264, -inf
    %267 = vmax.xlane.f32.xlu0 %v266
    %v268 = vpop.xlane.xlu0 %267
    %v269 = vsel %vm124, %v265, -inf
    %270 = vmax.xlane.f32.xlu0 %v269
    %v271 = vpop.xlane.xlu0 %270
    %vm272 = vcmp.eq.f32.partialorder %v264, %v268
    %vm273 = vcmp.eq.f32.partialorder %v265, %v271
    %v274 = vsel %vm272, %v123, 64
    %v275 = vsel %vm273, %v123, 64
    %v276 = vsel %vm124, %v274, 2147483647
    %v277 = vand.u32 %v276, 65535
    %v278 = vshra.s32 %v276, 16
    %v279 = vcvt.s32.f32 %v277
    %v280 = vcvt.s32.f32 %v278
    %281 = vmin.xlane.f32.xlu0 %v280
    %v282 = vpop.xlane.xlu0 %281
    %vm283 = vcmp.eq.f32.partialorder %v280, %v282
    %v284 = vsel %vm283, %v279, inf
    %285 = vmin.xlane.f32.xlu0 %v284
    %v286 = vpop.xlane.xlu0 %285
    %v287 = vcvt.f32.s32 %v286
    %v288 = vcvt.f32.s32 %v282
    %v289 = vshll.u32 %v288, 16
    %v290 = vadd.s32 %v289, %v287
    %v291 = vsel %vm124, %v275, 2147483647
    %v292 = vand.u32 %v291, 65535
    %v293 = vshra.s32 %v291, 16
    %v294 = vcvt.s32.f32 %v292
    %v295 = vcvt.s32.f32 %v293
    %296 = vmin.xlane.f32.xlu0 %v295
    %v297 = vpop.xlane.xlu0 %296
    %vm298 = vcmp.eq.f32.partialorder %v295, %v297
    %v299 = vsel %vm298, %v294, inf
    %300 = vmin.xlane.f32.xlu0 %v299
    %v301 = vpop.xlane.xlu0 %300
    %v302 = vcvt.f32.s32 %v301
    %v303 = vcvt.f32.s32 %v297
    %v304 = vshll.u32 %v303, 16
    %v305 = vadd.s32 %v304, %v302
    %vm306 = vcmp.eq.s32.totalorder %v123, 3
    %v307 = vsel %vm306, %v290, %v260
    %v308 = vsel %vm306, %v305, %v261
    %vm309 = vcmp.ge.f32.partialorder %v120, %v268
    %vm310 = vcmp.ge.f32.partialorder %v121, %v271
    %v311 = vsel %vm309, 1, 0
    %v312 = vsel %vm310, 1, 0
    %v313 = vcvt.s32.f32 %v311
    %v314 = vcvt.s32.f32 %v312
    %v315 = vmul.f32 %v120, %v313
    %v316 = vmul.f32 %v121, %v314
    %v317 = vld [vmem:[%s4] sm:$0xff]
    %v318 = vld [vmem:[%s4 + $0x8] sm:$0xff]
    %v319 = vld [vmem:[%s4 + $0x10] sm:$0xff]
    %v320 = vld [vmem:[%s4 + $0x18] sm:$0xff]
    %v321 = vld [vmem:[%s4 + $0x20] sm:$0xff]
    %v322 = vld [vmem:[%s4 + $0x28] sm:$0xff]
    %v323 = vld [vmem:[%s4 + $0x30] sm:$0xff]
    %v324 = vld [vmem:[%s4 + $0x38] sm:$0xff]
    %v325 = vld [vmem:[%s3] sm:$0x1]
    %v327 = vlaneseq
    %v328 = vshrl.u32 %v327, 7
    %v329 = vsub.s32 0, %v328
    %v330 = vrot.slane %v325, %v329
    %v333 = vsel %vm124, %v315, 0
    %v336 = vsel %vm124, %v316, 0
    %338 = vmatprep.subr.mxu0 0.0
    %339 = vmatpush1.msra.mxu0 %v317
    %340 = vmatprep.subr.mxu0 0.0
    %341 = vmatpush1.msra.mxu0 %v318
    %342 = vmatprep.subr.mxu0 0.0
    %343 = vmatpush1.msra.mxu0 %v319
    %344 = vmatprep.subr.mxu0 0.0
    %345 = vmatpush1.msra.mxu0 %v320
    %346 = vmatprep.subr.mxu0 0.0
    %347 = vmatpush1.msra.mxu0 %v321
    %348 = vmatprep.subr.mxu0 0.0
    %349 = vmatpush1.msra.mxu0 %v322
    %350 = vmatprep.subr.mxu0 0.0
    %351 = vmatpush1.msra.mxu0 %v323
    %352 = vmatprep.subr.mxu0 0.0
    %353 = vmatpush1.msra.mxu0 %v324
    %354 = vmatprep.subr.mxu0 0.0
    %355 = vmatpush1.msra.mxu0 0.0
    %356 = vmatprep.subr.mxu0 0.0
    %357 = vmatpush1.msra.mxu0 0.0
    %358 = vmatprep.subr.mxu0 0.0
    %359 = vmatpush1.msra.mxu0 0.0
    %360 = vmatprep.subr.mxu0 0.0
    %361 = vmatpush1.msra.mxu0 0.0
    %362 = vmatprep.subr.mxu0 0.0
    %363 = vmatpush1.msra.mxu0 0.0
    %364 = vmatprep.subr.mxu0 0.0
    %365 = vmatpush1.msra.mxu0 0.0
    %366 = vmatprep.subr.mxu0 0.0
    %367 = vmatpush1.msra.mxu0 0.0
    %368 = vmatprep.subr.mxu0 0.0
    %369 = vmatpush1.msra.mxu0 0.0
    %370 = vmatprep.subr.mxu0 0.0
    %371 = vmatpush1.msra.mxu0 0.0
    %372 = vmatprep.subr.mxu0 0.0
    %373 = vmatpush1.msra.mxu0 0.0
    %374 = vmatprep.subr.mxu0 0.0
    %375 = vmatpush1.msra.mxu0 0.0
    %376 = vmatprep.subr.mxu0 0.0
    %377 = vmatpush1.msra.mxu0 0.0
    %378 = vmatprep.subr.mxu0 0.0
    %379 = vmatpush1.msra.mxu0 0.0
    %380 = vmatprep.subr.mxu0 0.0
    %381 = vmatpush1.msra.mxu0 0.0
    %382 = vmatprep.subr.mxu0 0.0
    %383 = vmatpush1.msra.mxu0 0.0
    %384 = vmatprep.subr.mxu0 0.0
    %385 = vmatpush1.msra.mxu0 0.0
    %386 = vmatprep.subr.mxu0 0.0
    %387 = vmatpush1.msra.mxu0 0.0
    %388 = vmatprep.subr.mxu0 0.0
    %389 = vmatpush1.msra.mxu0 0.0
    %390 = vmatprep.subr.mxu0 0.0
    %391 = vmatpush1.msra.mxu0 0.0
    %392 = vmatprep.subr.mxu0 0.0
    %393 = vmatpush1.msra.mxu0 0.0
    %394 = vmatprep.subr.mxu0 0.0
    %395 = vmatpush1.msra.mxu0 0.0
    %396 = vmatprep.subr.mxu0 0.0
    %397 = vmatpush1.msra.mxu0 0.0
    %398 = vmatprep.subr.mxu0 0.0
    %399 = vmatpush1.msra.mxu0 0.0
    %400 = vmatprep.subr.mxu0 0.0
    %401 = vmatpush1.msra.mxu0 0.0
    %402 = vmatprep.mubr.f32.mxu0 0.0
    %403 = vmatmul.mubr.f32.gmra.mrb[0].mxu0 %v333
    %v404 = vpop.f32.mrb[0].mxu0
    %v405 = vadd.f32 %v330, %v404
    %v406 = vpop.f32.mrb[0].mxu0
    %407 = vmatprep.mubr.f32.mxu0 0.0
    %408 = vmatmul.mubr.f32.gmra.mrb[0].mxu0 %v336
    %v409 = vpop.f32.mrb[0].mxu0
    %v410 = vadd.f32 %v330, %v409
    %v411 = vpop.f32.mrb[0].mxu0
    %412 = vdwg.mxu0
    %413 = vst.msk [vmem:[#allocation4] sm:$0xff] %vm124, %v315
    %414 = vst.msk [vmem:[#allocation4 + $0x8] sm:$0xff] %vm124, %v316
    %415 = vst.msk [vmem:[#allocation2] sm:$0xff] %vm38, %v405
    %416 = vst.msk [vmem:[#allocation2 + $0x8] sm:$0xff] %vm38, %v410
    %417 = vst [vmem:[#allocation6] sm:$0xff] %v307
    %418 = vst [vmem:[#allocation6 + $0x8] sm:$0xff] %v308
    // Predicated region
    $region22: #{tpu_custom_call.1} parent=1 // pred_check
      _
    $region23: #{tpu_custom_call.1} parent=1 // pred_check_branch
      %420 = sbr.rel (0) target = $region25
    $region24: #{tpu_custom_call.1} parent=1 // pred_region
      %s422 = ssub.s32 256, 256
      %423 = vsyncadd [#allocation3], %s422
      %s424 = sshll.u32 [#allocation2], 4
      %s425 = int_to_ptr.vmem [resolvable:$true] %s424
      %430 = dma.vmem_to_hbm [thread:$0]  %s425, 256, %s5, [#allocation3], 128, 128, 8
    $region25: #{tpu_custom_call.1} parent=1 // pred_fallthru
      _
    // Predicated region
    $region26: #{tpu_custom_call.1} parent=1 // pred_check
      _
    $region27: #{tpu_custom_call.1} parent=1 // pred_check_branch
      %432 = sbr.rel (0) target = $region29
    $region28: #{tpu_custom_call.1} parent=1 // pred_region
      %s434 = ssub.s32 256, 256
      %435 = vsyncadd [#allocation5], %s434
      %s436 = sshll.u32 [#allocation4], 4
      %s437 = int_to_ptr.vmem [resolvable:$true] %s436
      %442 = dma.vmem_to_hbm [thread:$0]  %s437, 256, %s6, [#allocation5], 128, 128, 8
    $region29: #{tpu_custom_call.1} parent=1 // pred_fallthru
      _
    // Predicated region
    $region30: #{tpu_custom_call.1} parent=1 // pred_check
      _
    $region31: #{tpu_custom_call.1} parent=1 // pred_check_branch
      %444 = sbr.rel (0) target = $region33
    $region32: #{tpu_custom_call.1} parent=1 // pred_region
      %s446 = ssub.s32 256, 256
      %447 = vsyncadd [#allocation5], %s446
      %s448 = sshll.u32 [#allocation6], 4
      %s449 = int_to_ptr.vmem [resolvable:$true] %s448
      %454 = dma.vmem_to_hbm [thread:$0]  %s449, 256, %s7, [#allocation5], 128, 128, 8
    $region33: #{tpu_custom_call.1} parent=1 // pred_fallthru
      _
    // Predicated region
    $region34: #{tpu_custom_call.1} parent=1 // pred_check
      _
    $region35: #{tpu_custom_call.1} parent=1 // pred_check_branch
      %456 = sbr.rel (0) target = $region37
    $region36: #{tpu_custom_call.1} parent=1 // pred_region
      %457 = dma.done [#allocation3], 256
    $region37: #{tpu_custom_call.1} parent=1 // pred_fallthru
      _
    // Predicated region
    $region38: #{tpu_custom_call.1} parent=1 // pred_check
      _
    $region39: #{tpu_custom_call.1} parent=1 // pred_check_branch
      %459 = sbr.rel (0) target = $region41
    $region40: #{tpu_custom_call.1} parent=1 // pred_region
      %460 = dma.done [#allocation5], 256
    $region41: #{tpu_custom_call.1} parent=1 // pred_fallthru
      _
    // Predicated region
    $region42: #{tpu_custom_call.1} parent=1 // pred_check
      _
    $region43: #{tpu_custom_call.1} parent=1 // pred_check_branch
      %462 = sbr.rel (0) target = $region45
    $region44: #{tpu_custom_call.1} parent=1 // pred_region
      %463 = dma.done [#allocation5], 256
    $region45: #{tpu_custom_call.1} parent=1 // pred_fallthru
      _
    %464 = vsyncpa [#allocation3], 1
    %465 = vsyncpa [#allocation5], 1

</llo_original>
